<compile_context>
chip_gen: v7x
topology: tpu7x:2x2x1
jax: 0.10.0
libtpu: 0.0.40
codegen_flags: <defaults>
</compile_context>

<pallas_src>
import jax
import jax.numpy as jnp
from jax.experimental import pallas as pl
from jax.experimental.pallas import tpu as pltpu


# ----------------------------- Pallas kernel -------------------------------

def _negate_kernel(g_ref, o_ref):
    # Backward: grad_output.neg() -- straight load -> negate -> store so the
    # store slot / HBM bandwidth remains the only binding resource (v5e note).
    o_ref[...] = -g_ref[...]


# ------------------------------ layout helpers -----------------------------

def _as_lane_dense_2d(x):
    """Flatten to [rows, cols] with cols a multiple of 128 when possible."""
    shape = x.shape
    n = x.size
    # Prefer a lane-dense layout: full 128-lane vregs, unmasked stores.
    for cols in (1024, 512, 256, 128):
        if n % cols == 0:
            return x.reshape(n // cols, cols), shape
    # Fallback (element count not a multiple of 128): keep last dim as lanes.
    if x.ndim == 0:
        return x.reshape(1, 1), shape
    if x.ndim == 1:
        return x.reshape(1, n), shape
    return x.reshape(-1, shape[-1]), shape


def _tile_rows_for(rows, cols, dtype):
    """Pick a tile row count: ~2 MiB blocks, multiple of the sublane pack."""
    itemsize = jnp.dtype(dtype).itemsize
    pack = max(1, 32 // max(itemsize, 1))  # 8 for f32, 16 for bf16, 32 for int8
    target_bytes = 2 * 1024 * 1024         # ~2 MiB/block; ~8 MiB VMEM w/ dbl-buf
    tr = (target_bytes // max(cols * itemsize, 1)) // pack * pack
    tr = max(pack, tr)
    if tr >= rows:
        return rows                        # whole-array block (full-dim is legal)
    return tr


# --------------------------- backward negate call ---------------------------

def _negate_pallas(g):
    if g.size == 0:
        return g
    g2d, orig_shape = _as_lane_dense_2d(g)
    rows, cols = g2d.shape
    tile_rows = _tile_rows_for(rows, cols, g2d.dtype)
    grid = (pl.cdiv(rows, tile_rows),)

    n = g.size
    itemsize = jnp.dtype(g.dtype).itemsize

    out2d = pl.pallas_call(
        _negate_kernel,
        out_shape=jax.ShapeDtypeStruct((rows, cols), g2d.dtype),
        grid_spec=pltpu.PrefetchScalarGridSpec(
            num_scalar_prefetch=0,
            grid=grid,
            in_specs=[pl.BlockSpec((tile_rows, cols), lambda i: (i, 0))],
            out_specs=pl.BlockSpec((tile_rows, cols), lambda i: (i, 0)),
        ),
        compiler_params=pltpu.CompilerParams(
            dimension_semantics=("parallel",)),  # shards rows across v7x's 2 TCs
        cost_estimate=pl.CostEstimate(
            flops=n, transcendentals=0, bytes_accessed=2 * n * itemsize),
        input_output_aliases={0: 0},             # donate the gradient buffer
    )(g2d)
    return out2d.reshape(orig_shape)


# --------------------------- GradientReversal op ---------------------------

@jax.custom_vjp
def gradient_reversal(x):
    # Forward is identity: no kernel, no HBM traffic.
    return x


def _gr_fwd(x):
    return x, None


def _gr_bwd(_, g):
    return (_negate_pallas(g),)


gradient_reversal.defvjp(_gr_fwd, _gr_bwd)


# GradientReversal module has no parameters (its __init__ is empty), so there
# is nothing to initialize.

# --------------------------------- main -------------------------------------

if __name__ == "__main__":
    key = jax.random.PRNGKey(0)
    # layout: [B, C, H, W] = [2, 4, 16, 16] (matches PyTorch NCHW convention)
    x = jax.random.normal(key, (2, 4, 16, 16), dtype=jnp.float32)

    # Forward pass: identity (no kernel launch).
    y = jax.block_until_ready(gradient_reversal(x))
    assert y.shape == x.shape and y.dtype == x.dtype
    assert jnp.allclose(y, x), "forward must be identity"

    # Backward pass: runs the Pallas negate kernel.
    grad = jax.grad(lambda t: jnp.sum(gradient_reversal(t) * 2.0))(x)
    grad = jax.block_until_ready(grad)
    assert grad.shape == x.shape and grad.dtype == x.dtype
    assert jnp.allclose(grad, -2.0 * jnp.ones_like(x)), "backward must negate"

    print("KERNEL_OK")
</pallas_src>

<mosaic_0001>
module attributes {stable_mosaic.version = 11 : i64} {
  func.func @_negate_kernel(%arg0: i32, %arg1: memref<2x1024xf32, #tpu.memory_space<vmem>>, %arg2: memref<2x1024xf32, #tpu.memory_space<vmem>>) attributes {dimension_semantics = [#tpu.dimension_semantics<parallel>], iteration_bounds = array<i64: 1>, scalar_prefetch = 0 : i64, scratch_operands = 0 : i64, tpu.core_type = #tpu.core_type<tc>, window_params = [{transform_indices = @transform_0, window_bounds = array<i64: 2, 1024>}, {transform_indices = @transform_1, window_bounds = array<i64: 2, 1024>}]} {
    %c0 = arith.constant 0 : index
    %c0_0 = arith.constant 0 : index
    %0 = vector.load %arg1[%c0, %c0_0] : memref<2x1024xf32, #tpu.memory_space<vmem>>, vector<2x1024xf32>
    %cst = arith.constant 0.000000e+00 : f32
    %1 = vector.broadcast %cst : f32 to vector<2x1024xf32>
    %2 = arith.subf %1, %0 : vector<2x1024xf32>
    %c0_1 = arith.constant 0 : index
    %c0_2 = arith.constant 0 : index
    %3 = vector.load %arg2[%c0_1, %c0_2] : memref<2x1024xf32, #tpu.memory_space<vmem>>, vector<2x1024xf32>
    tpu.vector_store %arg2[%c0_1, %c0_2], %2 {strides = array<i32>} : memref<2x1024xf32, #tpu.memory_space<vmem>>, vector<2x1024xf32>,
    return
  }
  func.func @transform_0(%arg0: i32) -> (i32, i32) {
    %c0_i32 = arith.constant 0 : i32
    %c0_i32_0 = arith.constant 0 : i32
    return %arg0, %c0_i32 : i32, i32
  }
  func.func @transform_1(%arg0: i32) -> (i32, i32) {
    %c0_i32 = arith.constant 0 : i32
    %c0_i32_0 = arith.constant 0 : i32
    return %arg0, %c0_i32 : i32, i32
  }
}

</mosaic_0001>

<llo_original>
// kernel: tpu_custom_call.1
$region0: #{tpu_custom_call.1}
  #allocation0 [shape = 'u32[]', space=smem, size = 0x4, offset = 0x4, fixed_abs, tag = 'smem constant byte address 0x4 - core index']
  #allocation1 [shape = 'u32[144,128]{1,0:T(1,128)}', space=vmem, size = 0x12000, scoped, tag = 'internal scratch']
  %s0 = inlined_call_operand.hbm [shape: f32[2,1024], index: 0, kind: input, shape index: {}, may-alias: {0,1}]
  %s1 = inlined_call_operand.hbm [shape: f32[2,1024], index: 1, kind: output, shape index: {}, may-alias: {0,1}]
  %s2 = sld [smem:[#allocation0]]
  $region18: #{tpu_custom_call.1} parent=0
    _
  %s4 = ssub.s32 1, %s2
  %s5 = scalar_select 0, %s4, %s2
  $region1: #{tpu_custom_call.1} parent=0
    #allocation2 [shape = 'u8[8192]{0}', space=vmem, size = 0x2000, scoped, tag = 'input window, operand 0, single buffered']
    #allocation3 [shape = 's32[1]{0}', space=sflag, size = 0x4, scoped, tag = 'scoped memory for tpu_custom_call.1']
    #allocation4 [shape = 's32[1]{0}', space=sflag, size = 0x4, scoped, tag = 'scoped memory for tpu_custom_call.1']
    #allocation5 [shape = 'u8[8192]{0}', space=vmem, size = 0x2000, scoped, tag = 'output window, operand 0, single buffered']
    %6 = vsyncpa [#allocation3], 0
    %7 = vsyncpa [#allocation4], 0
    // Predicated region
    $region2: #{tpu_custom_call.1} parent=1 // pred_check
      _
    $region3: #{tpu_custom_call.1} parent=1 // pred_check_branch
      %9 = sbr.rel (0) target = $region5
    $region4: #{tpu_custom_call.1} parent=1 // pred_region
      %s11 = ssub.s32 256, 256
      %12 = vsyncadd [#allocation3], %s11
      %s14 = sshll.u32 [#allocation2], 4
      %s15 = int_to_ptr.vmem [resolvable:$true] %s14
      %17 = dma.hbm_to_vmem [thread:$0]  %s0, 256, %s15, [#allocation3]
    $region5: #{tpu_custom_call.1} parent=1 // pred_fallthru
      _
    // Predicated region
    $region6: #{tpu_custom_call.1} parent=1 // pred_check
      _
    $region7: #{tpu_custom_call.1} parent=1 // pred_check_branch
      %19 = sbr.rel (0) target = $region9
    $region8: #{tpu_custom_call.1} parent=1 // pred_region
      %20 = dma.done [#allocation3], 256
    $region9: #{tpu_custom_call.1} parent=1 // pred_fallthru
      _
    %v21 = vld [vmem:[#allocation2] sm:$0xff]
    %v22 = vld [vmem:[#allocation2 + $0x8] sm:$0xff]
    %v23 = vsub.f32 0.0, %v21
    %v24 = vsub.f32 0.0, %v22
    %25 = vst [vmem:[#allocation5] sm:$0xff] %v23
    %26 = vst [vmem:[#allocation5 + $0x8] sm:$0xff] %v24
    // Predicated region
    $region10: #{tpu_custom_call.1} parent=1 // pred_check
      _
    $region11: #{tpu_custom_call.1} parent=1 // pred_check_branch
      %28 = sbr.rel (0) target = $region13
    $region12: #{tpu_custom_call.1} parent=1 // pred_region
      %s30 = ssub.s32 256, 256
      %31 = vsyncadd [#allocation4], %s30
      %s33 = sshll.u32 [#allocation5], 4
      %s34 = int_to_ptr.vmem [resolvable:$true] %s33
      %36 = dma.vmem_to_hbm [thread:$0]  %s34, 256, %s1, [#allocation4]
    $region13: #{tpu_custom_call.1} parent=1 // pred_fallthru
      _
    // Predicated region
    $region14: #{tpu_custom_call.1} parent=1 // pred_check
      _
    $region15: #{tpu_custom_call.1} parent=1 // pred_check_branch
      %38 = sbr.rel (0) target = $region17
    $region16: #{tpu_custom_call.1} parent=1 // pred_region
      %39 = dma.done [#allocation4], 256
    $region17: #{tpu_custom_call.1} parent=1 // pred_fallthru
      _
    %40 = vsyncpa [#allocation3], 1
    %41 = vsyncpa [#allocation4], 1

</llo_original>
